<compile_context>
chip_gen: v7x
topology: tpu7x:2x2x1
jax: 0.10.0
libtpu: 0.0.40
codegen_flags: <defaults>
</compile_context>

<pallas_src>
import jax
import jax.numpy as jnp
from jax.experimental import pallas as pl
from jax.experimental.pallas import tpu as pltpu


def _round_up(x, m):
    return ((x + m - 1) // m) * m


def _conv_bn_relu_kernel(x_ref, w_ref, b_ref, o_ref):
    # x_ref: (1, C_in, tm)  -- max-pooled voxels, lane-dense on the voxel axis
    # w_ref: (C_out, C_in)  -- conv weight with BN scale folded in
    # b_ref: (C_out, 1)     -- conv bias with BN shift folded in (f32)
    # o_ref: (1, C_out, tm)
    y = jnp.dot(w_ref[...], x_ref[0],
                preferred_element_type=jnp.float32)        # 1x1x1 Conv3d on MXU, f32 acc
    y = y + b_ref[...]                                     # bias + folded BatchNorm3d
    o_ref[0] = jnp.maximum(y, 0.0).astype(o_ref.dtype)     # ReLU


def downsample_pool_blk_forward(x, conv_w, conv_b, bn_gamma, bn_beta,
                                bn_mean, bn_var, eps=1e-5, tm=4096,
                                compute_dtype=jnp.bfloat16,
                                out_dtype=jnp.float32):
    """x: (N, C_in, D, H, W) float32 NCDHW. Returns (N, C_out, D//2, H//2, W//2)."""
    N, Cin, D, H, W = x.shape
    Cout = conv_w.shape[0]
    Do, Ho, Wo = D // 2, H // 2, W // 2                    # MaxPool3d(2) floors odd dims
    S = Do * Ho * Wo

    # --- MaxPool3d(2) in the wrapper: one XLA reduce over a free reshape.  The result is
    # already in (N, Cin, Do, Ho, Wo) = (N, Cin, S) memory order -> no transpose anywhere.
    xc = x[:, :, :2 * Do, :2 * Ho, :2 * Wo]                # drop odd tail planes (floor)
    pooled = jnp.max(xc.reshape(N, Cin, Do, 2, Ho, 2, Wo, 2), axis=(3, 5, 7))
    pooled = pooled.astype(compute_dtype).reshape(N, Cin, S)

    # --- fold inference BatchNorm into the 1x1x1 conv ---
    scale = bn_gamma / jnp.sqrt(bn_var + eps)              # (Cout,)
    shift = bn_beta - bn_mean * scale                      # (Cout,)
    w2d = conv_w.reshape(Cout, Cin)
    w_folded = (w2d * scale[:, None]).astype(compute_dtype)             # (Cout, Cin)
    b_folded = (conv_b * scale + shift).reshape(Cout, 1).astype(jnp.float32)

    in_dsz = jnp.dtype(compute_dtype).itemsize
    out_dsz = jnp.dtype(out_dtype).itemsize
    sub_in = 16 if in_dsz == 2 else 8                      # sublane packing per dtype
    sub_out = 16 if out_dsz == 2 else 8
    cin_pad = _round_up(Cin, sub_in)
    cout_pad = _round_up(Cout, sub_out)

    # --- tile size: multiple of 256 lanes, clamped by S and by a VMEM budget sized so
    # double-buffered in+out tiles stay well under v7x's smaller VMEM. ---
    LANE = 256
    tm = max(_round_up(int(tm), LANE), LANE)
    tm = min(tm, _round_up(S, LANE))
    bytes_per_lane = 2 * (cin_pad * in_dsz + cout_pad * out_dsz)   # 2x = double buffer
    budget = 10 << 20
    tm = min(tm, max(LANE, (budget // bytes_per_lane) // LANE * LANE))
    # keep enough grid steps that v7x megacore ("parallel") has work for both TensorCores
    while tm > LANE and N * pl.cdiv(S, tm) < 8:
        tm = max(LANE, (tm // 2) // LANE * LANE)

    Sp = _round_up(S, tm)
    if Sp != S:
        pooled = jnp.pad(pooled, ((0, 0), (0, 0), (0, Sp - S)))   # tail cols discarded

    grid = (N, Sp // tm)

    # VMEM budget from actual padded block bytes (double-buffered) + small margin.
    in_blk = cin_pad * tm * in_dsz
    out_blk = cout_pad * tm * out_dsz
    w_bytes = cout_pad * max(Cin, 128) * in_dsz + cout_pad * 128 * 4
    vmem_limit = int(max(4 << 20, 4 * (in_blk + out_blk) + 2 * w_bytes + (2 << 20)))

    cost = pl.CostEstimate(
        flops=2 * N * S * Cin * Cout,
        transcendentals=0,
        bytes_accessed=N * S * (Cin * in_dsz + Cout * out_dsz) + Cin * Cout * in_dsz,
    )

    out_flat = pl.pallas_call(
        _conv_bn_relu_kernel,
        out_shape=jax.ShapeDtypeStruct((N, Cout, Sp), out_dtype),
        grid_spec=pltpu.PrefetchScalarGridSpec(
            num_scalar_prefetch=0,
            grid=grid,
            in_specs=[
                pl.BlockSpec((1, Cin, tm), lambda n, i: (n, 0, i)),
                pl.BlockSpec((Cout, Cin), lambda n, i: (0, 0)),
                pl.BlockSpec((Cout, 1), lambda n, i: (0, 0)),
            ],
            out_specs=pl.BlockSpec((1, Cout, tm), lambda n, i: (n, 0, i)),
        ),
        compiler_params=pltpu.CompilerParams(
            dimension_semantics=("parallel", "parallel"),
            vmem_limit_bytes=vmem_limit,
        ),
        cost_estimate=cost,
    )(pooled, w_folded, b_folded)

    # Already in NCDHW-compatible order: reshape is free (contiguous), no transpose.
    out = out_flat[:, :, :S].reshape(N, Cout, Do, Ho, Wo)
    return out


def _reference(x, conv_w, conv_b, bn_gamma, bn_beta, bn_mean, bn_var, eps=1e-5):
    N, Cin, D, H, W = x.shape
    Cout = conv_w.shape[0]
    xp = x.reshape(N, Cin, D // 2, 2, H // 2, 2, W // 2, 2)
    pooled = jnp.max(xp, axis=(3, 5, 7))                   # (N, Cin, Do, Ho, Wo)
    w2d = conv_w.reshape(Cout, Cin)
    y = jnp.einsum("ncdhw,oc->nodhw", pooled, w2d) + conv_b[None, :, None, None, None]
    scale = bn_gamma / jnp.sqrt(bn_var + eps)
    shift = bn_beta - bn_mean * scale
    y = y * scale[None, :, None, None, None] + shift[None, :, None, None, None]
    return jnp.maximum(y, 0.0)


if __name__ == "__main__":
    key = jax.random.PRNGKey(0)
    k_x, k_w, k_b, k_g, k_bt, k_m, k_v = jax.random.split(key, 7)

    N, Cin, Cout, D, H, W = 2, 4, 8, 16, 16, 16

    x = jax.random.normal(k_x, (N, Cin, D, H, W), dtype=jnp.float32)
    conv_w = jax.random.normal(k_w, (Cout, Cin, 1, 1, 1), dtype=jnp.float32) * 0.1
    conv_b = jax.random.normal(k_b, (Cout,), dtype=jnp.float32) * 0.1
    bn_gamma = 1.0 + 0.1 * jax.random.normal(k_g, (Cout,), dtype=jnp.float32)
    bn_beta = 0.1 * jax.random.normal(k_bt, (Cout,), dtype=jnp.float32)
    bn_mean = 0.1 * jax.random.normal(k_m, (Cout,), dtype=jnp.float32)
    bn_var = jnp.abs(1.0 + 0.1 * jax.random.normal(k_v, (Cout,), dtype=jnp.float32))

    ref = _reference(x, conv_w, conv_b, bn_gamma, bn_beta, bn_mean, bn_var)

    # Default path: bf16-staged pooled input, f32 output.
    out = downsample_pool_blk_forward(x, conv_w, conv_b, bn_gamma, bn_beta,
                                      bn_mean, bn_var)
    out = jax.block_until_ready(out)
    assert out.shape == (N, Cout, D // 2, H // 2, W // 2), out.shape
    assert jnp.allclose(out, ref, atol=5e-2, rtol=5e-2), "bf16 path mismatch vs reference"

    # Full-f32 path for a tight numerical check of the fused kernel itself.
    out32 = downsample_pool_blk_forward(x, conv_w, conv_b, bn_gamma, bn_beta,
                                        bn_mean, bn_var, compute_dtype=jnp.float32)
    out32 = jax.block_until_ready(out32)
    assert jnp.allclose(out32, ref, atol=1e-4, rtol=1e-4), "f32 path mismatch vs reference"

    # Optional bf16 output path (halves writeback) for consumers that tolerate it.
    out_bf = downsample_pool_blk_forward(x, conv_w, conv_b, bn_gamma, bn_beta,
                                         bn_mean, bn_var, out_dtype=jnp.bfloat16)
    out_bf = jax.block_until_ready(out_bf)
    assert out_bf.dtype == jnp.bfloat16
    assert jnp.allclose(out_bf.astype(jnp.float32), ref, atol=1e-1, rtol=1e-1), \
        "bf16-output path mismatch vs reference"

    print("KERNEL_OK")
</pallas_src>

<mosaic_0001>
module attributes {stable_mosaic.version = 11 : i64} {
  func.func @_conv_bn_relu_kernel(%arg0: i32, %arg1: i32, %arg2: memref<1x4x256xbf16, #tpu.memory_space<vmem>>, %arg3: memref<8x4xbf16, #tpu.memory_space<vmem>>, %arg4: memref<8x1xf32, #tpu.memory_space<vmem>>, %arg5: memref<1x8x256xf32, #tpu.memory_space<vmem>>) attributes {dimension_semantics = [#tpu.dimension_semantics<parallel>, #tpu.dimension_semantics<parallel>], iteration_bounds = array<i64: 2, 2>, scalar_prefetch = 0 : i64, scratch_operands = 0 : i64, tpu.core_type = #tpu.core_type<tc>, window_params = [{transform_indices = @transform_0, window_bounds = array<i64: 1, 4, 256>}, {pipeline_mode = #tpu.pipeline_mode<synchronous>, transform_indices = @transform_1, window_bounds = array<i64: 8, 4>}, {pipeline_mode = #tpu.pipeline_mode<synchronous>, transform_indices = @transform_2, window_bounds = array<i64: 8, 1>}, {transform_indices = @transform_3, window_bounds = array<i64: 1, 8, 256>}]} {
    %c0 = arith.constant 0 : index
    %c0_0 = arith.constant 0 : index
    %0 = vector.load %arg3[%c0, %c0_0] : memref<8x4xbf16, #tpu.memory_space<vmem>>, vector<8x4xbf16>
    %c0_1 = arith.constant 0 : index
    %c0_2 = arith.constant 0 : index
    %c0_3 = arith.constant 0 : index
    %1 = vector.load %arg2[%c0_1, %c0_2, %c0_3] : memref<1x4x256xbf16, #tpu.memory_space<vmem>>, vector<1x4x256xbf16>
    %2 = vector.shape_cast %1 : vector<1x4x256xbf16> to vector<4x256xbf16>
    %cst = arith.constant dense<0.000000e+00> : vector<8x256xf32>
    %3 = tpu.matmul %0, %2, %cst {dimension_numbers = #tpu.dot_dimension_numbers<[1], [0], [0], [1], [0, 0, 1, 1], [], []>} : vector<8x4xbf16>, vector<4x256xbf16>, vector<8x256xf32> -> vector<8x256xf32>
    %c0_4 = arith.constant 0 : index
    %c0_5 = arith.constant 0 : index
    %4 = vector.load %arg4[%c0_4, %c0_5] : memref<8x1xf32, #tpu.memory_space<vmem>>, vector<8x1xf32>
    %5 = vector.broadcast %4 : vector<8x1xf32> to vector<8x256xf32>
    %6 = arith.addf %3, %5 : vector<8x256xf32>
    %cst_6 = arith.constant 0.000000e+00 : f32
    %7 = vector.broadcast %cst_6 : f32 to vector<8x256xf32>
    %8 = arith.maximumf %6, %7 : vector<8x256xf32>
    %c0_7 = arith.constant 0 : index
    %c0_8 = arith.constant 0 : index
    %c0_9 = arith.constant 0 : index
    %9 = vector.load %arg5[%c0_7, %c0_8, %c0_9] : memref<1x8x256xf32, #tpu.memory_space<vmem>>, vector<1x8x256xf32>
    %10 = vector.shape_cast %9 : vector<1x8x256xf32> to vector<8x256xf32>
    %11 = vector.shape_cast %8 : vector<8x256xf32> to vector<1x8x256xf32>
    tpu.vector_store %arg5[%c0_7, %c0_8, %c0_9], %11 {strides = array<i32>} : memref<1x8x256xf32, #tpu.memory_space<vmem>>, vector<1x8x256xf32>,
    return
  }
  func.func @transform_0(%arg0: i32, %arg1: i32) -> (i32, i32, i32) {
    %c0_i32 = arith.constant 0 : i32
    %c0_i32_0 = arith.constant 0 : i32
    return %arg0, %c0_i32, %arg1 : i32, i32, i32
  }
  func.func @transform_1(%arg0: i32, %arg1: i32) -> (i32, i32) {
    %c0_i32 = arith.constant 0 : i32
    %c0_i32_0 = arith.constant 0 : i32
    %c0_i32_1 = arith.constant 0 : i32
    return %c0_i32, %c0_i32_0 : i32, i32
  }
  func.func @transform_2(%arg0: i32, %arg1: i32) -> (i32, i32) {
    %c0_i32 = arith.constant 0 : i32
    %c0_i32_0 = arith.constant 0 : i32
    %c0_i32_1 = arith.constant 0 : i32
    return %c0_i32, %c0_i32_0 : i32, i32
  }
  func.func @transform_3(%arg0: i32, %arg1: i32) -> (i32, i32, i32) {
    %c0_i32 = arith.constant 0 : i32
    %c0_i32_0 = arith.constant 0 : i32
    return %arg0, %c0_i32, %arg1 : i32, i32, i32
  }
}

</mosaic_0001>

<llo_original>
// kernel: tpu_custom_call.1
$region0: #{tpu_custom_call.1}
  #allocation0 [shape = 'u32[]', space=smem, size = 0x4, offset = 0x4, fixed_abs, tag = 'smem constant byte address 0x4 - core index']
  #allocation1 [shape = 'u32[144,128]{1,0:T(1,128)}', space=vmem, size = 0x12000, scoped, tag = 'internal scratch']
  %s0 = inlined_call_operand.hbm [shape: bf16[2,4,512], index: 0, kind: input, shape index: {}]
  %s1 = inlined_call_operand.vmem [shape: bf16[8,4], index: 1, kind: input, shape index: {}]
  %s2 = inlined_call_operand.vmem [shape: f32[8,1], index: 2, kind: input, shape index: {}]
  %s3 = inlined_call_operand.hbm [shape: f32[2,8,512], index: 3, kind: output, shape index: {}]
  %s4 = sld [smem:[#allocation0]]
  $region49: #{tpu_custom_call.1} parent=0
    _
  %s6 = ssub.s32 1, %s4
  %s7 = scalar_select 0, %s6, %s4
  $region1: #{tpu_custom_call.1} parent=0
    #allocation2 [shape = 'u8[4096]{0}', space=vmem, size = 0x1000, scoped, tag = 'input window, operand 0']
    #allocation3 [shape = 's32[2]{0}', space=sflag, size = 0x8, scoped, tag = 'scoped memory for tpu_custom_call.1']
    #allocation4 [shape = 's32[2]{0}', space=sflag, size = 0x8, scoped, tag = 'scoped memory for tpu_custom_call.1']
    #allocation5 [shape = 'u8[16384]{0}', space=vmem, size = 0x4000, scoped, tag = 'output window, operand 0']
    %8 = vsyncpa [#allocation3], 0
    %s9 = scalar_lea.sflag [#allocation3], 1
    %10 = vsyncpa %s9, 0
    %11 = vsyncpa [#allocation4], 0
    %s12 = scalar_lea.sflag [#allocation4], 1
    %13 = vsyncpa %s12, 0
    loop: start=0, step=1, limit=6
    $region2: #{tpu_custom_call.1} parent=1 // loop_pre_header
      _
    $region3: #{tpu_custom_call.1} parent=1 // loop_header
      %s15 = sphi 0, %s19
      %p16 = scmp.ge.s32.totalorder %s15, 6
      %s22 = sphi 0, %s34
      %s23 = sphi 0, %s30
      %s24 = sphi 0, %s22
      %s25 = sphi 0, %s23
      %s26 = sphi 0, %s24
      %s27 = sphi 0, %s25
      %s39 = sphi 0, %s41
      %s42 = sphi 0, %s39
      %s43 = sphi 0, %s42
      %s59 = sphi 0, %s43
      %s63 = sphi 0, %s63
      %s65 = sphi 0, %s63
      %s66 = sphi 0, %s65
      %s80 = sphi 0, %s66
      %s84 = sphi 0, %s84
      %s86 = sphi 0, %s84
      %s87 = sphi 0, %s86
      %s101 = sphi 0, %s87
      %s109 = sphi 0, %s111
      %s112 = sphi 0, %s109
      %s113 = sphi 0, %s112
      %s129 = sphi 0, %s113
    $region4: #{tpu_custom_call.1} parent=1 // loop_header_branch
      %18 = sbr.rel (%p16) target = $region8
    $region5: #{tpu_custom_call.1} parent=1 // loop_body
      %s20 = ssub.s32 %s15, 1
      %s21 = ssub.s32 %s15, 2
      %s28 = sadd.s32 1, %s23
      %p29 = scmp.ge.s32.totalorder %s28, 2
      %s30 = scalar_select %p29, 0, %s28
      %s31 = sadd.s32 1, %s22
      %s32 = scalar_select %p29, %s31, %s22
      %p33 = scmp.ge.s32.totalorder %s32, 2
      %s34 = scalar_select %p33, 0, %s32
      %s35 = ssub.s32 %s22, %s34
      %s36 = ssub.s32 %s23, %s30
      %s37 = sor.u32 %s35, %s36
      %p38 = scmp.eq.s32.totalorder %s37, 0
      %s40 = sadd.s32 %s39, 1
      %s41 = scalar_select %p38, %s39, %s40
      %p44 = pneg %p38
      %p45 = scmp.eq.s32.totalorder %s15, 3
      %p46 = por %p44, %p45
      %p47 = scmp.ne.s32.totalorder %s39, %s42
      %p48 = scmp.eq.s32.totalorder %s15, 0
      %p49 = por %p47, %p48
      %p50 = scmp.ne.s32.totalorder %s39, %s42
      %p51 = scmp.eq.s32.totalorder %s20, 3
      %p52 = por %p50, %p51
      %p53 = scmp.ne.s32.totalorder %s42, %s43
      %p54 = scmp.eq.s32.totalorder %s20, 0
      %p55 = por %p53, %p54
      %p56 = scmp.ne.s32.totalorder %s42, %s43
      %p57 = scmp.eq.s32.totalorder %s21, 3
      %p58 = por %p56, %p57
      %p60 = scmp.ne.s32.totalorder %s43, %s59
      %p61 = scmp.eq.s32.totalorder %s21, 0
      %p62 = por %p60, %p61
      %s64 = sadd.s32 %s63, 1
      %p67 = scmp.eq.s32.totalorder %s15, 3
      %p68 = scmp.ne.s32.totalorder %s63, %s65
      %p69 = scmp.eq.s32.totalorder %s15, 0
      %p70 = por %p68, %p69
      %p71 = scmp.ne.s32.totalorder %s63, %s65
      %p72 = scmp.eq.s32.totalorder %s20, 3
      %p73 = por %p71, %p72
      %p74 = scmp.ne.s32.totalorder %s65, %s66
      %p75 = scmp.eq.s32.totalorder %s20, 0
      %p76 = por %p74, %p75
      %p77 = scmp.ne.s32.totalorder %s65, %s66
      %p78 = scmp.eq.s32.totalorder %s21, 3
      %p79 = por %p77, %p78
      %p81 = scmp.ne.s32.totalorder %s66, %s80
      %p82 = scmp.eq.s32.totalorder %s21, 0
      %p83 = por %p81, %p82
      %s85 = sadd.s32 %s84, 1
      %p88 = scmp.eq.s32.totalorder %s15, 3
      %p89 = scmp.ne.s32.totalorder %s84, %s86
      %p90 = scmp.eq.s32.totalorder %s15, 0
      %p91 = por %p89, %p90
      %p92 = scmp.ne.s32.totalorder %s84, %s86
      %p93 = scmp.eq.s32.totalorder %s20, 3
      %p94 = por %p92, %p93
      %p95 = scmp.ne.s32.totalorder %s86, %s87
      %p96 = scmp.eq.s32.totalorder %s20, 0
      %p97 = por %p95, %p96
      %p98 = scmp.ne.s32.totalorder %s86, %s87
      %p99 = scmp.eq.s32.totalorder %s21, 3
      %p100 = por %p98, %p99
      %p102 = scmp.ne.s32.totalorder %s87, %s101
      %p103 = scmp.eq.s32.totalorder %s21, 0
      %p104 = por %p102, %p103
      %s105 = ssub.s32 %s22, %s34
      %s106 = ssub.s32 %s23, %s30
      %s107 = sor.u32 %s105, %s106
      %p108 = scmp.eq.s32.totalorder %s107, 0
      %s110 = sadd.s32 %s109, 1
      %s111 = scalar_select %p108, %s109, %s110
      %p114 = pneg %p108
      %p115 = scmp.eq.s32.totalorder %s15, 3
      %p116 = por %p114, %p115
      %p117 = scmp.ne.s32.totalorder %s109, %s112
      %p118 = scmp.eq.s32.totalorder %s15, 0
      %p119 = por %p117, %p118
      %p120 = scmp.ne.s32.totalorder %s109, %s112
      %p121 = scmp.eq.s32.totalorder %s20, 3
      %p122 = por %p120, %p121
      %p123 = scmp.ne.s32.totalorder %s112, %s113
      %p124 = scmp.eq.s32.totalorder %s20, 0
      %p125 = por %p123, %p124
      %p126 = scmp.ne.s32.totalorder %s112, %s113
      %p127 = scmp.eq.s32.totalorder %s21, 3
      %p128 = por %p126, %p127
      %p130 = scmp.ne.s32.totalorder %s113, %s129
      %p131 = scmp.eq.s32.totalorder %s21, 0
      %p132 = por %p130, %p131
      %p133 = scmp.le.s32.totalorder 1, %s15
      %p134 = scmp.lt.s32.totalorder %s15, 5
      %p135 = pnand %p133, %p134
      %p136 = pneg %p135
      // Predicated region
      $region9: #{tpu_custom_call.1} parent=5 // pred_check
        _
      $region10: #{tpu_custom_call.1} parent=5 // pred_check_branch
        %138 = sbr.rel (%p135) target = $region12
      $region11: #{tpu_custom_call.1} parent=5 // pred_region
        %s139 = ssub.s32 %s15, 1
        // Predicated region
        $region13: #{tpu_custom_call.1} parent=11 // pred_check
          %p140 = pneg %p76
        $region14: #{tpu_custom_call.1} parent=11 // pred_check_branch
          %142 = sbr.rel (%p140) target = $region16
        $region15: #{tpu_custom_call.1} parent=11 // pred_region
          _
        $region16: #{tpu_custom_call.1} parent=11 // pred_fallthru
          _
        // Predicated region
        $region17: #{tpu_custom_call.1} parent=11 // pred_check
          %p143 = pneg %p97
        $region18: #{tpu_custom_call.1} parent=11 // pred_check_branch
          %145 = sbr.rel (%p143) target = $region20
        $region19: #{tpu_custom_call.1} parent=11 // pred_region
          _
        $region20: #{tpu_custom_call.1} parent=11 // pred_fallthru
          _
      $region12: #{tpu_custom_call.1} parent=5 // pred_fallthru
        _
      %p146 = scmp.lt.s32.totalorder %s15, 4
      // Predicated region
      $region21: #{tpu_custom_call.1} parent=5 // pred_check
        %p147 = pneg %p146
      $region22: #{tpu_custom_call.1} parent=5 // pred_check_branch
        %149 = sbr.rel (%p147) target = $region24
      $region23: #{tpu_custom_call.1} parent=5 // pred_region
        // Predicated region
        $region25: #{tpu_custom_call.1} parent=23 // pred_check
          %p150 = pneg %p49
        $region26: #{tpu_custom_call.1} parent=23 // pred_check_branch
          %152 = sbr.rel (%p150) target = $region28
        $region27: #{tpu_custom_call.1} parent=23 // pred_region
          %s153 = sand.u32 %s39, 1
          %s154 = scalar_lea.sflag [#allocation3], %s153
          %s155 = sand.u32 %s39, 1
          %s156 = smul.addr %s155, 4
          %s157 = scalar_lea.vmem [#allocation2], %s156
          %s158 = smul.u32 2, %s23
          %s160 = ssub.s32 64, 64
          %161 = vsyncadd %s154, %s160
          %s162 = smul.addr %s22, 4
          %s163 = sadd.s32 %s158, %s162
          %s164 = smul.addr %s163, 32
          %s165 = scalar_lea.hbm %s0, %s164
          %s167 = sshll.u32 %s157, 4
          %s168 = int_to_ptr.vmem [resolvable:$true] %s167
          %170 = dma.hbm_to_vmem [thread:$0]  %s165, 64, %s168, %s154
        $region28: #{tpu_custom_call.1} parent=23 // pred_fallthru
          _
      $region24: #{tpu_custom_call.1} parent=5 // pred_fallthru
        _
      %p171 = scmp.le.s32.totalorder 1, %s15
      %p172 = scmp.lt.s32.totalorder %s15, 5
      %p173 = pnand %p171, %p172
      %p174 = pneg %p173
      // Predicated region
      $region29: #{tpu_custom_call.1} parent=5 // pred_check
        _
      $region30: #{tpu_custom_call.1} parent=5 // pred_check_branch
        %176 = sbr.rel (%p173) target = $region32
      $region31: #{tpu_custom_call.1} parent=5 // pred_region
        %s177 = ssub.s32 %s15, 1
        %s178 = sand.u32 %s42, 1
        %s179 = scalar_lea.sflag [#allocation3], %s178
        %s180 = sand.u32 %s42, 1
        %s181 = smul.addr %s180, 4
        %s182 = scalar_lea.vmem [#allocation2], %s181
        // Predicated region
        $region33: #{tpu_custom_call.1} parent=31 // pred_check
          %p183 = pneg %p55
        $region34: #{tpu_custom_call.1} parent=31 // pred_check_branch
          %185 = sbr.rel (%p183) target = $region36
        $region35: #{tpu_custom_call.1} parent=31 // pred_region
          %186 = dma.done %s179, 64
        $region36: #{tpu_custom_call.1} parent=31 // pred_fallthru
          _
        %s187 = sand.u32 %s42, 1
        %s188 = scalar_lea.sflag [#allocation3], %s187
        %s189 = sand.u32 %s42, 1
        %s190 = smul.addr %s189, 4
        %s191 = scalar_lea.vmem [#allocation2], %s190
        %p192 = pneg %p55
        %p193 = pneg %p52
        %p194 = pneg %p76
        %p195 = pneg %p73
        %p196 = pneg %p97
        %p197 = pneg %p94
        %p198 = pneg %p125
        %p199 = pneg %p122
        %s200 = sand.u32 %s112, 1
        %s201 = scalar_lea.sflag [#allocation4], %s200
        %s202 = sand.u32 %s112, 1
        %s203 = smul.addr %s202, 16
        %s204 = scalar_lea.vmem [#allocation5], %s203
        %s205 = smul.u32 2, %s25
        %s206 = smul.u32 2, %s25
        %v208 = vld [vmem:[%s1] sm:$0xf]
        %v209 = vld [vmem:[%s182] sm:$0xf]
        %v210 = vld [vmem:[%s2] sm:$0xff]
        %212 = vset.pattern.permute.xlu0 0
        %213 = vperm.xlu0 %212, %v210
        %v214 = vpop.permute.xlu0 %213
        %v218 = vunpack.c.l.s4 1983009808
        %v219 = vunpack.c.0.s8 %v218
        %v220 = vlaneseq
        %v221 = vshrl.u32 %v220, 7
        %v222 = vsub.s32 %v219, %v221
        %v223 = vrot.slane %v209, %v222
        %v224 = vcombine.high %v223, %v223
        %vm225 = vcmask 31744
        %v227 = vsel %vm225, %v208, 0
        %vm229 = vcmask 1041408
        %v231 = vsel %vm229, %v223, 0
        %v234 = vsel %vm229, %v224, 0
        %236 = vmatprep.subr.bf16.mxu0 %v234
        %237 = vmatpush1.bf16.msra.mxu0 %v231
        %238 = vmatprep.subr.bf16.mxu0 0
        %239 = vmatpush1.bf16.msra.mxu0 0
        %240 = vmatprep.subr.bf16.mxu0 0
        %241 = vmatpush1.bf16.msra.mxu0 0
        %242 = vmatprep.subr.bf16.mxu0 0
        %243 = vmatpush1.bf16.msra.mxu0 0
        %244 = vmatprep.subr.bf16.mxu0 0
        %245 = vmatpush1.bf16.msra.mxu0 0
        %246 = vmatprep.subr.bf16.mxu0 0
        %247 = vmatpush1.bf16.msra.mxu0 0
        %248 = vmatprep.subr.bf16.mxu0 0
        %249 = vmatpush1.bf16.msra.mxu0 0
        %250 = vmatprep.subr.bf16.mxu0 0
        %251 = vmatpush1.bf16.msra.mxu0 0
        %252 = vmatprep.subr.bf16.mxu0 0
        %253 = vmatpush1.bf16.msra.mxu0 0
        %254 = vmatprep.subr.bf16.mxu0 0
        %255 = vmatpush1.bf16.msra.mxu0 0
        %256 = vmatprep.subr.bf16.mxu0 0
        %257 = vmatpush1.bf16.msra.mxu0 0
        %258 = vmatprep.subr.bf16.mxu0 0
        %259 = vmatpush1.bf16.msra.mxu0 0
        %260 = vmatprep.subr.bf16.mxu0 0
        %261 = vmatpush1.bf16.msra.mxu0 0
        %262 = vmatprep.subr.bf16.mxu0 0
        %263 = vmatpush1.bf16.msra.mxu0 0
        %264 = vmatprep.subr.bf16.mxu0 0
        %265 = vmatpush1.bf16.msra.mxu0 0
        %266 = vmatprep.subr.bf16.mxu0 0
        %267 = vmatpush1.bf16.msra.mxu0 0
        %268 = vmatprep.mubr.bf16.mxu0 0
        %269 = vmatmul.mubr.bf16.gmra.mrb[0].mxu0 %v227
        %v270 = vpop.f32.mrb[0].mxu0
        %v271 = vadd.f32 %v214, %v270
        %v272 = vpop.f32.mrb[0].mxu0
        %v273 = vadd.f32 %v214, %v272
        %v274 = vpop.f32.mrb[0].mxu0
        %v275 = vpop.f32.mrb[0].mxu0
        %276 = vdwg.mxu0
        %v277 = vmax.f32 %v271, 0.0
        %v278 = vmax.f32 %v273, 0.0
        %279 = vst [vmem:[%s204] sm:$0xff] %v277
        %280 = vst [vmem:[%s204 + $0x8] sm:$0xff] %v278
        %s281 = sand.u32 %s112, 1
        %s282 = scalar_lea.sflag [#allocation4], %s281
        %s283 = sand.u32 %s112, 1
        %s284 = smul.addr %s283, 16
        %s285 = scalar_lea.vmem [#allocation5], %s284
        // Predicated region
        $region37: #{tpu_custom_call.1} parent=31 // pred_check
          %p286 = pneg %p122
        $region38: #{tpu_custom_call.1} parent=31 // pred_check_branch
          %288 = sbr.rel (%p286) target = $region40
        $region39: #{tpu_custom_call.1} parent=31 // pred_region
          %s289 = smul.u32 2, %s25
          %s291 = ssub.s32 256, 256
          %292 = vsyncadd %s282, %s291
          %s293 = smul.addr %s24, 4
          %s294 = sadd.s32 %s289, %s293
          %s295 = smul.addr %s294, 128
          %s296 = scalar_lea.hbm %s3, %s295
          %s298 = sshll.u32 %s285, 4
          %s299 = int_to_ptr.vmem [resolvable:$true] %s298
          %301 = dma.vmem_to_hbm [thread:$0]  %s299, 256, %s296, %s282
        $region40: #{tpu_custom_call.1} parent=31 // pred_fallthru
          _
      $region32: #{tpu_custom_call.1} parent=5 // pred_fallthru
        _
      %p302 = scmp.le.s32.totalorder 2, %s15
      // Predicated region
      $region41: #{tpu_custom_call.1} parent=5 // pred_check
        %p303 = pneg %p302
      $region42: #{tpu_custom_call.1} parent=5 // pred_check_branch
        %305 = sbr.rel (%p303) target = $region44
      $region43: #{tpu_custom_call.1} parent=5 // pred_region
        %s306 = ssub.s32 %s15, 2
        // Predicated region
        $region45: #{tpu_custom_call.1} parent=43 // pred_check
          %p307 = pneg %p128
        $region46: #{tpu_custom_call.1} parent=43 // pred_check_branch
          %309 = sbr.rel (%p307) target = $region48
        $region47: #{tpu_custom_call.1} parent=43 // pred_region
          %s310 = sand.u32 %s113, 1
          %s311 = scalar_lea.sflag [#allocation4], %s310
          %s312 = sand.u32 %s113, 1
          %s313 = smul.addr %s312, 16
          %s314 = scalar_lea.vmem [#allocation5], %s313
          %315 = dma.done %s311, 256
        $region48: #{tpu_custom_call.1} parent=43 // pred_fallthru
          _
      $region44: #{tpu_custom_call.1} parent=5 // pred_fallthru
        _
    $region6: #{tpu_custom_call.1} parent=1 // loop_footer
      %s19 = sadd.s32 1, %s15
    $region7: #{tpu_custom_call.1} parent=1 // loop_footer_branch
      %14 = sbr.rel target = $region3
    $region8: #{tpu_custom_call.1} parent=1 // loop_exit
      _
    %316 = vsyncpa [#allocation3], 1
    %s317 = scalar_lea.sflag [#allocation3], 1
    %318 = vsyncpa %s317, 1
    %319 = vsyncpa [#allocation4], 1
    %s320 = scalar_lea.sflag [#allocation4], 1
    %321 = vsyncpa %s320, 1

</llo_original>
